<compile_context>
chip_gen: v7x
topology: tpu7x:2x2x1
jax: 0.10.0
libtpu: 0.0.40
codegen_flags: <defaults>
</compile_context>

<pallas_src>
import functools

import jax
import jax.numpy as jnp
from jax.experimental import pallas as pl
from jax.experimental.pallas import tpu as pltpu


def _round_up(x: int, m: int) -> int:
    return (x + m - 1) // m * m


def _vmem_capacity_bytes() -> int:
    """Per-core VMEM capacity; conservative fallback if the query fails."""
    try:
        cap = getattr(pltpu.get_tpu_info(), "vmem_capacity_bytes", None)
        if cap:
            return int(cap)
    except Exception:
        pass
    return 64 * 1024 * 1024  # conservative default (v7x per-TensorCore VMEM)


def _avg_readout_kernel(mask_ref, emb_ref, out_ref, vsum_acc, rsum_acc,
                        *, compute_dtype):
    k = pl.program_id(1)

    @pl.when(k == 0)
    def _init():
        vsum_acc[...] = jnp.zeros_like(vsum_acc)
        rsum_acc[...] = jnp.zeros_like(rsum_acc)

    mask_tile = mask_ref[...]                       # (TM, TN), at-rest dtype
    emb_tile = emb_ref[...]                         # (TN, Dp), compute dtype

    # Partial mask @ emb on the MXU (bf16 x bf16 by default), f32 accumulate.
    vsum_acc[...] += jnp.dot(mask_tile.astype(compute_dtype), emb_tile,
                             preferred_element_type=jnp.float32)
    # Partial row-sum from the un-cast mask tile, accumulated in f32 (exact).
    rsum_acc[...] += jnp.sum(mask_tile, axis=1, keepdims=True,
                             dtype=jnp.float32)

    @pl.when(k == pl.num_programs(1) - 1)
    def _finalize():
        vsum = vsum_acc[...]                                  # (TM, Dp) f32
        rsum = rsum_acc[...]                                  # (TM, 1)  f32
        inv_row = 1.0 / rsum
        sq = jnp.sum(vsum * vsum, axis=1, keepdims=True)      # (TM, 1)
        # ||global_emb|| = ||vsum|| / row_sum ; eps clamp matches F.normalize.
        inv_norm = 1.0 / jnp.maximum(jnp.sqrt(sq) * inv_row, 1e-12)
        out_ref[...] = (vsum * (inv_row * inv_norm)).astype(out_ref.dtype)


@functools.partial(
    jax.jit, static_argnames=("tm", "tn", "compute_dtype", "out_dtype")
)
def avg_readout(
    emb: jax.Array,
    mask: jax.Array,
    *,
    tm: int = 256,
    tn: int | None = None,        # None -> prefer full-N tiles (resident emb)
    compute_dtype=jnp.bfloat16,   # MXU operand / emb stream dtype
    out_dtype=jnp.float32,
) -> jax.Array:
    """emb: (N, D), mask: (M, N) -> (M, D) row-L2-normalized mean readout."""
    M, N = mask.shape
    N2, D = emb.shape
    assert N == N2, "mask and emb node dims must match"

    Dp = _round_up(D, 128)                  # lane-dense emb / output blocks
    Np_full = _round_up(N, 128)

    # ---- generation-aware VMEM budget (v5e/v6e: 128 MiB, v7x: 64 MiB/TC) ----
    vmem_cap = _vmem_capacity_bytes()
    vmem_limit = min(int(vmem_cap * 0.75), 100 * 1024 * 1024)
    budget = int(vmem_limit * 0.7)

    # ---- tile sizes ----
    # TM multiple of 16 (bf16 sublane packing); ensure >= 2 M tiles when M
    # allows so v7x's second TensorCore gets work on the "parallel" axis.
    TM = min(tm, _round_up(M, 16))
    if M > 16:
        TM = min(TM, _round_up((M + 1) // 2, 16))
    # Prefer TN == full padded N: constant emb block index -> emb DMA'd once.
    TN = Np_full if tn is None else min(_round_up(tn, 128), Np_full)

    mask_b = jnp.dtype(mask.dtype).itemsize
    cmp_b = jnp.dtype(compute_dtype).itemsize
    out_b = jnp.dtype(out_dtype).itemsize

    def _vmem_bytes(tm_, tn_):
        return (
            2 * tm_ * tn_ * mask_b        # mask double buffer
            + 2 * tn_ * Dp * cmp_b        # emb double buffer
            + 2 * tm_ * Dp * out_b        # output double buffer
            + tm_ * Dp * 4                # vsum accumulator
            + tm_ * 128 * 4               # row-sum accumulator (lane-padded)
        )

    while _vmem_bytes(TM, TN) > budget and TN > 128:
        TN = max(128, _round_up(TN // 2, 128))
    while _vmem_bytes(TM, TN) > budget and TM > 16:
        TM = max(16, _round_up(TM // 2, 16))
    # TODO(synk): for very large D add a D-tile grid axis + separate small
    # normalization pass instead of letting the accumulator shrink TN.

    Mp = _round_up(M, TM)
    Np = _round_up(N, TN)

    # Zero padding only when required (no-op for aligned shapes).  The emb
    # cast to the compute dtype fuses with its pad into a single pass; the
    # mask keeps its at-rest dtype so row sums stay exact.
    emb_c = emb if emb.dtype == compute_dtype else emb.astype(compute_dtype)
    if (Np != N) or (Dp != D):
        emb_c = jnp.pad(emb_c, ((0, Np - N), (0, Dp - D)))
    mask_p = mask
    if (Mp != M) or (Np != N):
        mask_p = jnp.pad(mask, ((0, Mp - M), (0, Np - N)))

    grid = (Mp // TM, Np // TN)

    out = pl.pallas_call(
        functools.partial(_avg_readout_kernel, compute_dtype=compute_dtype),
        out_shape=jax.ShapeDtypeStruct((Mp, Dp), out_dtype),
        grid_spec=pltpu.PrefetchScalarGridSpec(
            num_scalar_prefetch=0,
            grid=grid,
            in_specs=[
                pl.BlockSpec((TM, TN), lambda i, k: (i, k)),   # mask tile
                pl.BlockSpec((TN, Dp), lambda i, k: (k, 0)),   # emb tile
            ],
            out_specs=pl.BlockSpec((TM, Dp), lambda i, k: (i, 0)),
            scratch_shapes=[
                pltpu.VMEM((TM, Dp), jnp.float32),   # vsum accumulator
                pltpu.VMEM((TM, 1), jnp.float32),    # row-sum accumulator
            ],
        ),
        compiler_params=pltpu.CompilerParams(
            dimension_semantics=("parallel", "arbitrary"),
            vmem_limit_bytes=vmem_limit,
        ),
    )(mask_p, emb_c)

    return out[:M, :D]


def _reference(emb, mask):
    vsum = mask @ emb
    row_sum = jnp.sum(mask, axis=1, keepdims=True)
    global_emb = vsum / row_sum
    norm = jnp.maximum(
        jnp.linalg.norm(global_emb, axis=1, keepdims=True), 1e-12
    )
    return global_emb / norm


if __name__ == "__main__":
    key = jax.random.PRNGKey(0)
    k1, k2, k3, k4 = jax.random.split(key, 4)

    # ---- Test 1: small shapes (resident-emb path, single grid step on N) ----
    M, N, D = 8, 16, 32
    # Round emb to bf16-representable values so the check is insensitive to
    # the bf16 MXU path (mask is 0/1, so products are exact either way).
    emb = jax.random.normal(k1, (N, D), dtype=jnp.float32)
    emb = emb.astype(jnp.bfloat16).astype(jnp.float32)
    mask = (jax.random.uniform(k2, (M, N)) > 0.5).astype(jnp.float32)
    mask = mask.at[:, 0].set(1.0)  # guarantee positive row sums

    out = avg_readout(emb, mask)
    jax.block_until_ready(out)
    ref = _reference(emb, mask)
    assert out.shape == (M, D)
    assert jnp.allclose(out, ref, atol=1e-5, rtol=1e-4), "mismatch vs reference (small)"

    # ---- Test 2: exercises M-tiling, N-reduction accumulation, M/N/D padding ----
    M2, N2, D2 = 24, 300, 160
    emb2 = jax.random.normal(k3, (N2, D2), dtype=jnp.float32)
    emb2 = emb2.astype(jnp.bfloat16).astype(jnp.float32)
    mask2 = (jax.random.uniform(k4, (M2, N2)) > 0.5).astype(jnp.float32)
    mask2 = mask2.at[:, 0].set(1.0)

    out2 = avg_readout(emb2, mask2, tm=16, tn=128)   # grid = (2, 3)
    jax.block_until_ready(out2)
    ref2 = _reference(emb2, mask2)
    assert out2.shape == (M2, D2)
    assert jnp.allclose(out2, ref2, atol=1e-5, rtol=1e-4), "mismatch vs reference (tiled)"

    print("KERNEL_OK")
</pallas_src>

<mosaic_0001>
module attributes {stable_mosaic.version = 11 : i64} {
  func.func @_avg_readout_kernel(%arg0: i32, %arg1: i32, %arg2: memref<16x128xf32, #tpu.memory_space<vmem>>, %arg3: memref<128x128xbf16, #tpu.memory_space<vmem>>, %arg4: memref<16x128xf32, #tpu.memory_space<vmem>>, %arg5: memref<16x128xf32, #tpu.memory_space<vmem>>, %arg6: memref<16x1xf32, #tpu.memory_space<vmem>>) attributes {dimension_semantics = [#tpu.dimension_semantics<parallel>, #tpu.dimension_semantics<arbitrary>], iteration_bounds = array<i64: 1, 1>, scalar_prefetch = 0 : i64, scratch_operands = 2 : i64, tpu.core_type = #tpu.core_type<tc>, window_params = [{transform_indices = @transform_0, window_bounds = array<i64: 16, 128>}, {transform_indices = @transform_1, window_bounds = array<i64: 128, 128>}, {transform_indices = @transform_2, window_bounds = array<i64: 16, 128>}]} {
    %c0_i32 = arith.constant 0 : i32
    %0 = arith.cmpi eq, %arg1, %c0_i32 : i32
    %1 = arith.extui %0 : i1 to i32
    %c0_i32_0 = arith.constant 0 : i32
    %2 = arith.cmpi ne, %1, %c0_i32_0 : i32
    scf.if %2 {
      %cst_15 = arith.constant 0.000000e+00 : f32
      %18 = vector.broadcast %cst_15 : f32 to vector<16x128xf32>
      %c0_16 = arith.constant 0 : index
      %c0_17 = arith.constant 0 : index
      %19 = vector.load %arg5[%c0_16, %c0_17] : memref<16x128xf32, #tpu.memory_space<vmem>>, vector<16x128xf32>
      tpu.vector_store %arg5[%c0_16, %c0_17], %18 {strides = array<i32>} : memref<16x128xf32, #tpu.memory_space<vmem>>, vector<16x128xf32>,
      %cst_18 = arith.constant 0.000000e+00 : f32
      %20 = vector.broadcast %cst_18 : f32 to vector<16x1xf32>
      %c0_19 = arith.constant 0 : index
      %c0_20 = arith.constant 0 : index
      %21 = vector.load %arg6[%c0_19, %c0_20] : memref<16x1xf32, #tpu.memory_space<vmem>>, vector<16x1xf32>
      tpu.vector_store %arg6[%c0_19, %c0_20], %20 {strides = array<i32>} : memref<16x1xf32, #tpu.memory_space<vmem>>, vector<16x1xf32>,
    } else {
    }
    %c0 = arith.constant 0 : index
    %c0_1 = arith.constant 0 : index
    %3 = vector.load %arg2[%c0, %c0_1] : memref<16x128xf32, #tpu.memory_space<vmem>>, vector<16x128xf32>
    %c0_2 = arith.constant 0 : index
    %c0_3 = arith.constant 0 : index
    %4 = vector.load %arg3[%c0_2, %c0_3] : memref<128x128xbf16, #tpu.memory_space<vmem>>, vector<128x128xbf16>
    %c0_4 = arith.constant 0 : index
    %c0_5 = arith.constant 0 : index
    %5 = vector.load %arg5[%c0_4, %c0_5] : memref<16x128xf32, #tpu.memory_space<vmem>>, vector<16x128xf32>
    %6 = arith.truncf %3 : vector<16x128xf32> to vector<16x128xbf16>
    %cst = arith.constant dense<0.000000e+00> : vector<16x128xf32>
    %7 = tpu.matmul %6, %4, %cst {dimension_numbers = #tpu.dot_dimension_numbers<[1], [0], [0], [1], [0, 0, 1, 1], [], []>} : vector<16x128xbf16>, vector<128x128xbf16>, vector<16x128xf32> -> vector<16x128xf32>
    %8 = arith.addf %5, %7 : vector<16x128xf32>
    %c0_6 = arith.constant 0 : index
    %c0_7 = arith.constant 0 : index
    %9 = vector.load %arg5[%c0_6, %c0_7] : memref<16x128xf32, #tpu.memory_space<vmem>>, vector<16x128xf32>
    tpu.vector_store %arg5[%c0_6, %c0_7], %8 {strides = array<i32>} : memref<16x128xf32, #tpu.memory_space<vmem>>, vector<16x128xf32>,
    %c0_8 = arith.constant 0 : index
    %c0_9 = arith.constant 0 : index
    %10 = vector.load %arg6[%c0_8, %c0_9] : memref<16x1xf32, #tpu.memory_space<vmem>>, vector<16x1xf32>
    %cst_10 = arith.constant dense<0.000000e+00> : vector<16xf32>
    %11 = vector.multi_reduction <add>, %3, %cst_10 [1] : vector<16x128xf32> to vector<16xf32>
    %12 = vector.shape_cast %11 : vector<16xf32> to vector<16x1xf32>
    %13 = arith.addf %10, %12 : vector<16x1xf32>
    %c0_11 = arith.constant 0 : index
    %c0_12 = arith.constant 0 : index
    %14 = vector.load %arg6[%c0_11, %c0_12] : memref<16x1xf32, #tpu.memory_space<vmem>>, vector<16x1xf32>
    tpu.vector_store %arg6[%c0_11, %c0_12], %13 {strides = array<i32>} : memref<16x1xf32, #tpu.memory_space<vmem>>, vector<16x1xf32>,
    %c0_i32_13 = arith.constant 0 : i32
    %15 = arith.cmpi eq, %arg1, %c0_i32_13 : i32
    %16 = arith.extui %15 : i1 to i32
    %c0_i32_14 = arith.constant 0 : i32
    %17 = arith.cmpi ne, %16, %c0_i32_14 : i32
    scf.if %17 {
      %c0_15 = arith.constant 0 : index
      %c0_16 = arith.constant 0 : index
      %18 = vector.load %arg5[%c0_15, %c0_16] : memref<16x128xf32, #tpu.memory_space<vmem>>, vector<16x128xf32>
      %c0_17 = arith.constant 0 : index
      %c0_18 = arith.constant 0 : index
      %19 = vector.load %arg6[%c0_17, %c0_18] : memref<16x1xf32, #tpu.memory_space<vmem>>, vector<16x1xf32>
      %cst_19 = arith.constant 1.000000e+00 : f32
      %20 = vector.broadcast %cst_19 : f32 to vector<16x1xf32>
      %21 = arith.divf %20, %19 : vector<16x1xf32>
      %22 = arith.mulf %18, %18 : vector<16x128xf32>
      %cst_20 = arith.constant dense<0.000000e+00> : vector<16xf32>
      %23 = vector.multi_reduction <add>, %22, %cst_20 [1] : vector<16x128xf32> to vector<16xf32>
      %24 = vector.shape_cast %23 : vector<16xf32> to vector<16x1xf32>
      %25 = math.sqrt %24 : vector<16x1xf32>
      %26 = arith.mulf %25, %21 : vector<16x1xf32>
      %cst_21 = arith.constant 9.99999996E-13 : f32
      %27 = vector.broadcast %cst_21 : f32 to vector<16x1xf32>
      %28 = arith.maximumf %26, %27 : vector<16x1xf32>
      %cst_22 = arith.constant 1.000000e+00 : f32
      %29 = vector.broadcast %cst_22 : f32 to vector<16x1xf32>
      %30 = arith.divf %29, %28 : vector<16x1xf32>
      %31 = arith.mulf %21, %30 : vector<16x1xf32>
      %32 = vector.broadcast %31 : vector<16x1xf32> to vector<16x128xf32>
      %33 = arith.mulf %18, %32 : vector<16x128xf32>
      %c0_23 = arith.constant 0 : index
      %c0_24 = arith.constant 0 : index
      %34 = vector.load %arg4[%c0_23, %c0_24] : memref<16x128xf32, #tpu.memory_space<vmem>>, vector<16x128xf32>
      tpu.vector_store %arg4[%c0_23, %c0_24], %33 {strides = array<i32>} : memref<16x128xf32, #tpu.memory_space<vmem>>, vector<16x128xf32>,
    } else {
    }
    return
  }
  func.func @transform_0(%arg0: i32, %arg1: i32) -> (i32, i32) {
    %c0_i32 = arith.constant 0 : i32
    return %arg0, %arg1 : i32, i32
  }
  func.func @transform_1(%arg0: i32, %arg1: i32) -> (i32, i32) {
    %c0_i32 = arith.constant 0 : i32
    %c0_i32_0 = arith.constant 0 : i32
    return %arg1, %c0_i32 : i32, i32
  }
  func.func @transform_2(%arg0: i32, %arg1: i32) -> (i32, i32) {
    %c0_i32 = arith.constant 0 : i32
    %c0_i32_0 = arith.constant 0 : i32
    return %arg0, %c0_i32 : i32, i32
  }
}

</mosaic_0001>

<llo_original>
// kernel: avg_readout.1
$region0: #{avg_readout.1}
  #allocation0 [shape = 'u32[]', space=smem, size = 0x4, offset = 0x4, fixed_abs, tag = 'smem constant byte address 0x4 - core index']
  #allocation1 [shape = 'u32[144,128]{1,0:T(1,128)}', space=vmem, size = 0x12000, scoped, tag = 'internal scratch']
  #allocation2 [shape = 'f32[16,128]{1,0:T(8,128)}', space=vmem, size = 0x2000, scoped, tag = 'scratch operand']
  #allocation3 [shape = 'f32[16,1]{1,0:T(8,128)}', space=vmem, size = 0x2000, scoped, tag = 'scratch operand']
  %s0 = inlined_call_operand.vmem [shape: f32[16,128], index: 0, kind: input, shape index: {}]
  %s1 = inlined_call_operand.vmem [shape: bf16[128,128], index: 1, kind: input, shape index: {}]
  %s2 = inlined_call_operand.vmem [shape: f32[16,128], index: 2, kind: output, shape index: {}]
  %s3 = sld [smem:[#allocation0]]
  $region26: #{avg_readout.1} parent=0
    _
  %s5 = ssub.s32 1, %s3
  %s6 = scalar_select 0, %s5, %s3
  // Predicated region
  $region2: #{avg_readout.1} parent=0 // pred_check
    _
  $region3: #{avg_readout.1} parent=0 // pred_check_branch
    %8 = sbr.rel (0) target = $region5
  $region4: #{avg_readout.1} parent=0 // pred_region
    _
  $region5: #{avg_readout.1} parent=0 // pred_fallthru
    _
  // Predicated region
  $region6: #{avg_readout.1} parent=0 // pred_check
    _
  $region7: #{avg_readout.1} parent=0 // pred_check_branch
    %10 = sbr.rel (0) target = $region9
  $region8: #{avg_readout.1} parent=0 // pred_region
    _
  $region9: #{avg_readout.1} parent=0 // pred_fallthru
    _
  %p12 = scmp.eq.s32.totalorder 0, 0
  // Predicated region
  $region10: #{avg_readout.1} parent=0 // pred_check
    %p13 = pneg %p12
  $region11: #{avg_readout.1} parent=0 // pred_check_branch
    %15 = sbr.rel (%p13) target = $region13
  $region12: #{avg_readout.1} parent=0 // pred_region
    %16 = vst [vmem:[#allocation2] sm:$0xff] 0.0
    %17 = vst [vmem:[#allocation2 + $0x8] sm:$0xff] 0.0
    %vm18 = vcmask 7168
    %19 = vst.msk [vmem:[#allocation3] sm:$0xff] %vm18, 0.0
    %20 = vst.msk [vmem:[#allocation3 + $0x8] sm:$0xff] %vm18, 0.0
  $region13: #{avg_readout.1} parent=0 // pred_fallthru
    _
  %v21 = vld [vmem:[%s0] sm:$0xff]
  %v22 = vld [vmem:[%s0 + $0x8] sm:$0xff]
  %v23 = vld [vmem:[%s1] sm:$0xf]
  %v24 = vld [vmem:[%s1 + $0x4] sm:$0xf]
  %v25 = vld [vmem:[%s1 + $0x8] sm:$0xf]
  %v26 = vld [vmem:[%s1 + $0xc] sm:$0xf]
  %v27 = vld [vmem:[%s1 + $0x10] sm:$0xf]
  %v28 = vld [vmem:[%s1 + $0x14] sm:$0xf]
  %v29 = vld [vmem:[%s1 + $0x18] sm:$0xf]
  %v30 = vld [vmem:[%s1 + $0x1c] sm:$0xf]
  %v31 = vld [vmem:[%s1 + $0x20] sm:$0xf]
  %v32 = vld [vmem:[%s1 + $0x24] sm:$0xf]
  %v33 = vld [vmem:[%s1 + $0x28] sm:$0xf]
  %v34 = vld [vmem:[%s1 + $0x2c] sm:$0xf]
  %v35 = vld [vmem:[%s1 + $0x30] sm:$0xf]
  %v36 = vld [vmem:[%s1 + $0x34] sm:$0xf]
  %v37 = vld [vmem:[%s1 + $0x38] sm:$0xf]
  %v38 = vld [vmem:[%s1 + $0x3c] sm:$0xf]
  %v39 = vld [vmem:[#allocation2] sm:$0xff]
  %v40 = vld [vmem:[#allocation2 + $0x8] sm:$0xff]
  %v41 = vpack.c.bf16 %v22, %v21
  %v58 = vunpack.c.l.b16 %v23
  %v59 = vunpack.c.l.b16 %v24
  %v60 = vunpack.c.l.b16 %v25
  %v61 = vunpack.c.l.b16 %v26
  %v62 = vunpack.c.l.b16 %v27
  %v63 = vunpack.c.l.b16 %v28
  %v64 = vunpack.c.l.b16 %v29
  %v65 = vunpack.c.l.b16 %v30
  %v66 = vunpack.c.l.b16 %v31
  %v67 = vunpack.c.l.b16 %v32
  %v68 = vunpack.c.l.b16 %v33
  %v69 = vunpack.c.l.b16 %v34
  %v70 = vunpack.c.l.b16 %v35
  %v71 = vunpack.c.l.b16 %v36
  %v72 = vunpack.c.l.b16 %v37
  %v73 = vunpack.c.l.b16 %v38
  %v74 = vpack.c.b16 %v59, %v58
  %v75 = vpack.c.b16 %v61, %v60
  %v76 = vpack.c.b16 %v63, %v62
  %v77 = vpack.c.b16 %v65, %v64
  %v78 = vpack.c.b16 %v67, %v66
  %v79 = vpack.c.b16 %v69, %v68
  %v80 = vpack.c.b16 %v71, %v70
  %v81 = vpack.c.b16 %v73, %v72
  %90 = vmatprep.subr.bf16.mxu0 0
  %91 = vmatpush1.bf16.msra.mxu0 %v74
  %92 = vmatprep.subr.bf16.mxu0 0
  %93 = vmatpush1.bf16.msra.mxu0 %v75
  %94 = vmatprep.subr.bf16.mxu0 0
  %95 = vmatpush1.bf16.msra.mxu0 %v76
  %96 = vmatprep.subr.bf16.mxu0 0
  %97 = vmatpush1.bf16.msra.mxu0 %v77
  %98 = vmatprep.subr.bf16.mxu0 0
  %99 = vmatpush1.bf16.msra.mxu0 %v78
  %100 = vmatprep.subr.bf16.mxu0 0
  %101 = vmatpush1.bf16.msra.mxu0 %v79
  %102 = vmatprep.subr.bf16.mxu0 0
  %103 = vmatpush1.bf16.msra.mxu0 %v80
  %104 = vmatprep.subr.bf16.mxu0 0
  %105 = vmatpush1.bf16.msra.mxu0 %v81
  %106 = vmatprep.subr.bf16.mxu0 0
  %107 = vmatpush1.bf16.msra.mxu0 0
  %108 = vmatprep.subr.bf16.mxu0 0
  %109 = vmatpush1.bf16.msra.mxu0 0
  %110 = vmatprep.subr.bf16.mxu0 0
  %111 = vmatpush1.bf16.msra.mxu0 0
  %112 = vmatprep.subr.bf16.mxu0 0
  %113 = vmatpush1.bf16.msra.mxu0 0
  %114 = vmatprep.subr.bf16.mxu0 0
  %115 = vmatpush1.bf16.msra.mxu0 0
  %116 = vmatprep.subr.bf16.mxu0 0
  %117 = vmatpush1.bf16.msra.mxu0 0
  %118 = vmatprep.subr.bf16.mxu0 0
  %119 = vmatpush1.bf16.msra.mxu0 0
  %120 = vmatprep.subr.bf16.mxu0 0
  %121 = vmatpush1.bf16.msra.mxu0 0
  %122 = vmatprep.mubr.bf16.mxu0 0
  %123 = vmatmul.mubr.bf16.gmra.mrb[0].mxu0 %v41
  %v124 = vpop.f32.mrb[0].mxu0
  %v125 = vadd.f32 0.0, %v124
  %v126 = vpop.f32.mrb[0].mxu0
  %v127 = vpop.f32.mrb[0].mxu0
  %v128 = vadd.f32 0.0, %v127
  %v129 = vpop.f32.mrb[0].mxu0
  %130 = vdwg.mxu0
  %v131 = vadd.f32 %v39, %v125
  %v132 = vadd.f32 %v40, %v128
  %133 = vst [vmem:[#allocation2] sm:$0xff] %v131
  %134 = vst [vmem:[#allocation2 + $0x8] sm:$0xff] %v132
  %v135 = vld [vmem:[#allocation3] sm:$0xff]
  %v136 = vld [vmem:[#allocation3 + $0x8] sm:$0xff]
  %137 = vadd.xlane.f32.xlu0 %v21
  %v138 = vpop.xlane.xlu0 %137
  %139 = vadd.xlane.f32.xlu0 %v22
  %v140 = vpop.xlane.xlu0 %139
  %v141 = vadd.f32 %v135, %v138
  %v142 = vadd.f32 %v136, %v140
  %vm143 = vcmask 7168
  %144 = vst.msk [vmem:[#allocation3] sm:$0xff] %vm143, %v141
  %145 = vst.msk [vmem:[#allocation3 + $0x8] sm:$0xff] %vm143, %v142
  // Predicated region
  $region14: #{avg_readout.1} parent=0 // pred_check
    %p146 = pneg %p12
  $region15: #{avg_readout.1} parent=0 // pred_check_branch
    %148 = sbr.rel (%p146) target = $region17
  $region16: #{avg_readout.1} parent=0 // pred_region
    %v149 = vld [vmem:[#allocation2] sm:$0xff]
    %v150 = vld [vmem:[#allocation2 + $0x8] sm:$0xff]
    %v151 = vld [vmem:[#allocation3] sm:$0xff]
    %v152 = vld [vmem:[#allocation3 + $0x8] sm:$0xff]
    %v153 = vrcp.pop %v151
    %v154 = vmul.f32 1.0, %v153
    %v155 = vrcp.pop %v152
    %v156 = vmul.f32 1.0, %v155
    %v157 = vmul.f32 %v149, %v149
    %v158 = vmul.f32 %v150, %v150
    %159 = vadd.xlane.f32.xlu0 %v157
    %v160 = vpop.xlane.xlu0 %159
    %161 = vadd.xlane.f32.xlu0 %v158
    %v162 = vpop.xlane.xlu0 %161
    %v163 = vrsqrt.pop %v160
    %v164 = vmul.f32 %v160, %v163
    %vm165 = vcmp.eq.f32.partialorder %v160, inf
    %v166 = vsel %vm165, %v160, %v164
    %vm167 = vcmp.eq.f32.partialorder %v160, 0.0
    %v168 = vand.u32 %v160, 2147483648
    %v169 = vsel %vm167, %v168, %v166
    %v170 = vrsqrt.pop %v162
    %v171 = vmul.f32 %v162, %v170
    %vm172 = vcmp.eq.f32.partialorder %v162, inf
    %v173 = vsel %vm172, %v162, %v171
    %vm174 = vcmp.eq.f32.partialorder %v162, 0.0
    %v175 = vand.u32 %v162, 2147483648
    %v176 = vsel %vm174, %v175, %v173
    %v177 = vmul.f32 %v169, %v154
    %v178 = vmul.f32 %v176, %v156
    %v179 = vmax.f32 %v177, 1e-12
    %v180 = vmax.f32 %v178, 1e-12
    %v181 = vrcp.pop %v179
    %v182 = vmul.f32 1.0, %v181
    %v183 = vrcp.pop %v180
    %v184 = vmul.f32 1.0, %v183
    %v185 = vmul.f32 %v154, %v182
    %v186 = vmul.f32 %v156, %v184
    %188 = vset.pattern.permute.xlu0 0
    %189 = vperm.xlu0 %188, %v185
    %v190 = vpop.permute.xlu0 %189
    %193 = vset.pattern.permute.xlu0 0
    %194 = vperm.xlu0 %193, %v186
    %v195 = vpop.permute.xlu0 %194
    %v197 = vmul.f32 %v149, %v190
    %v198 = vmul.f32 %v150, %v195
    %199 = vst [vmem:[%s2] sm:$0xff] %v197
    %200 = vst [vmem:[%s2 + $0x8] sm:$0xff] %v198
  $region17: #{avg_readout.1} parent=0 // pred_fallthru
    _
  // Predicated region
  $region18: #{avg_readout.1} parent=0 // pred_check
    _
  $region19: #{avg_readout.1} parent=0 // pred_check_branch
    %202 = sbr.rel (0) target = $region21
  $region20: #{avg_readout.1} parent=0 // pred_region
    _
  $region21: #{avg_readout.1} parent=0 // pred_fallthru
    _
  // Predicated region
  $region22: #{avg_readout.1} parent=0 // pred_check
    _
  $region23: #{avg_readout.1} parent=0 // pred_check_branch
    %204 = sbr.rel (0) target = $region25
  $region24: #{avg_readout.1} parent=0 // pred_region
    _
  $region25: #{avg_readout.1} parent=0 // pred_fallthru
    _

</llo_original>
